<compile_context>
chip_gen: v7x
topology: tpu7x:2x2x1
jax: 0.10.0
libtpu: 0.0.40
codegen_flags: <defaults>
</compile_context>

<pallas_src>
import jax
import jax.numpy as jnp
from jax import lax
from jax.experimental import pallas as pl
from jax.experimental.pallas import tpu as pltpu


def _round_up(x: int, m: int) -> int:
    return ((x + m - 1) // m) * m


def _out_head_kernel(x_ref, w_ref, out_ref):
    # x_ref:   (tile_m, D) bf16   fused tok+pos activations for this M tile
    # w_ref:   (tv, D)    bf16    slice of out_head weight (PyTorch (V, D))
    # out_ref: (tile_m, tv) f32   logits tile
    #
    # Contract on the last axis of both operands: (tile_m, D) x (tv, D) ->
    # (tile_m, tv). Transposed-RHS MXU path, f32 accumulation.
    out_ref[...] = lax.dot_general(
        x_ref[...], w_ref[...],
        dimension_numbers=(((1,), (1,)), ((), ())),
        preferred_element_type=jnp.float32,
    ).astype(out_ref.dtype)


def dummy_gpt_forward(in_idx, tok_emb_w, pos_emb_w, out_head_w, *,
                      tile_m_max=512, tv_max=2048,
                      vmem_budget_bytes=48 << 20):
    """in_idx: (B, T) int32 token ids.
    tok_emb_w: (vocab, D), pos_emb_w: (ctx, D), out_head_w: (vocab, D)."""
    B, T = in_idx.shape
    V, D = out_head_w.shape
    M = B * T

    # --- JAX glue: embedding gather + fused tok+pos add (then bf16 cast). ---
    # TODO(synk): dropout / transformer blocks / final norm are identity in the
    # dummy model (eval mode); drop_rate is unused.
    x = (jnp.take(tok_emb_w, in_idx.reshape(M), axis=0)
         + jnp.tile(pos_emb_w[:T], (B, 1)))                 # (M, D) f32
    x = x.astype(jnp.bfloat16)
    w = out_head_w.astype(jnp.bfloat16)

    # --- tile sizing (bf16 sublane tile = 16 rows, lane-dense vocab tiles) ---
    tile_m = min(tile_m_max, _round_up(M, 16))
    tv = min(tv_max, _round_up(V, 128))

    def footprint(tm, tvv):
        # double-buffered x, W and output tiles
        return 2 * (tm * D * 2 + tvv * D * 2 + tm * tvv * 4)

    while footprint(tile_m, tv) > vmem_budget_bytes and tv > 128:
        tv = max(128, (tv // 2 // 128) * 128)
    while footprint(tile_m, tv) > vmem_budget_bytes and tile_m > 16:
        tile_m = max(16, (tile_m // 2 // 16) * 16)

    m_pad = _round_up(M, tile_m)
    v_pad = _round_up(V, tv)
    if m_pad != M:
        x = jnp.pad(x, ((0, m_pad - M), (0, 0)))
    if v_pad != V:
        w = jnp.pad(w, ((0, v_pad - V), (0, 0)))

    # Vocab-outer / M-inner grid: W tile is resident across the M sweep, so
    # the (V, D) weight is streamed from HBM exactly once.
    grid = (v_pad // tv, m_pad // tile_m)

    vmem_limit = int(min(max(2 * footprint(tile_m, tv) + (4 << 20), 32 << 20),
                         96 << 20))

    logits_flat = pl.pallas_call(
        _out_head_kernel,
        out_shape=jax.ShapeDtypeStruct((m_pad, v_pad), jnp.float32),
        grid_spec=pltpu.PrefetchScalarGridSpec(
            num_scalar_prefetch=0,
            grid=grid,
            in_specs=[
                pl.BlockSpec((tile_m, D), lambda j, i: (i, 0)),   # x (M tile)
                pl.BlockSpec((tv, D), lambda j, i: (j, 0)),       # W (V tile)
            ],
            out_specs=pl.BlockSpec((tile_m, tv), lambda j, i: (i, j)),
        ),
        compiler_params=pltpu.CompilerParams(
            # No scratch / no cross-step state -> both axes independent
            # (megacore-shardable on v7x).
            dimension_semantics=("parallel", "parallel"),
            vmem_limit_bytes=vmem_limit),
    )(x, w)

    return logits_flat[:M, :V].reshape(B, T, V)


def reference_forward(in_idx, tok_emb_w, pos_emb_w, out_head_w):
    """Reference with the same bf16-operand / f32-accumulation numerics."""
    T = in_idx.shape[1]
    x = jnp.take(tok_emb_w, in_idx, axis=0) + pos_emb_w[:T]
    return jnp.einsum("btd,vd->btv",
                      x.astype(jnp.bfloat16),
                      out_head_w.astype(jnp.bfloat16),
                      preferred_element_type=jnp.float32)


def _run_case(key, *, vocab_size, context_length, emb_dim, B, T):
    k_tok, k_pos, k_out, k_idx = jax.random.split(key, 4)
    tok_emb_w = jax.random.normal(k_tok, (vocab_size, emb_dim), jnp.float32)
    pos_emb_w = jax.random.normal(k_pos, (context_length, emb_dim), jnp.float32)
    out_head_w = jax.random.normal(k_out, (vocab_size, emb_dim),
                                   jnp.float32) * 0.02
    in_idx = jax.random.randint(k_idx, (B, T), 0, vocab_size, dtype=jnp.int32)

    logits = dummy_gpt_forward(in_idx, tok_emb_w, pos_emb_w, out_head_w)
    logits = jax.block_until_ready(logits)

    ref = reference_forward(in_idx, tok_emb_w, pos_emb_w, out_head_w)
    assert logits.shape == (B, T, vocab_size)
    assert jnp.allclose(logits, ref, atol=2e-3, rtol=2e-3)


if __name__ == "__main__":
    key = jax.random.PRNGKey(0)
    k0, k1 = jax.random.split(key)

    # Case 1: the original toy config (everything divides evenly).
    _run_case(k0, vocab_size=256, context_length=16, emb_dim=128, B=2, T=8)

    # Case 2: ragged sizes (V not a multiple of 128, B*T not a multiple of 16)
    # to exercise the padding / tail-handling path.
    _run_case(k1, vocab_size=200, context_length=16, emb_dim=128, B=3, T=5)

    print("KERNEL_OK")
</pallas_src>

<mosaic_0001>
module attributes {stable_mosaic.version = 11 : i64} {
  func.func @_out_head_kernel(%arg0: i32, %arg1: i32, %arg2: memref<16x128xbf16, #tpu.memory_space<vmem>>, %arg3: memref<256x128xbf16, #tpu.memory_space<vmem>>, %arg4: memref<16x256xf32, #tpu.memory_space<vmem>>) attributes {dimension_semantics = [#tpu.dimension_semantics<parallel>, #tpu.dimension_semantics<parallel>], iteration_bounds = array<i64: 1, 1>, scalar_prefetch = 0 : i64, scratch_operands = 0 : i64, tpu.core_type = #tpu.core_type<tc>, window_params = [{transform_indices = @transform_0, window_bounds = array<i64: 16, 128>}, {transform_indices = @transform_1, window_bounds = array<i64: 256, 128>}, {transform_indices = @transform_2, window_bounds = array<i64: 16, 256>}]} {
    %c0 = arith.constant 0 : index
    %c0_0 = arith.constant 0 : index
    %0 = vector.load %arg2[%c0, %c0_0] : memref<16x128xbf16, #tpu.memory_space<vmem>>, vector<16x128xbf16>
    %c0_1 = arith.constant 0 : index
    %c0_2 = arith.constant 0 : index
    %1 = vector.load %arg3[%c0_1, %c0_2] : memref<256x128xbf16, #tpu.memory_space<vmem>>, vector<256x128xbf16>
    %cst = arith.constant dense<0.000000e+00> : vector<16x256xf32>
    %2 = tpu.matmul %0, %1, %cst {dimension_numbers = #tpu.dot_dimension_numbers<[1], [1], [0], [0], [0, 0, 1, 0], [], []>} : vector<16x128xbf16>, vector<256x128xbf16>, vector<16x256xf32> -> vector<16x256xf32>
    %c0_3 = arith.constant 0 : index
    %c0_4 = arith.constant 0 : index
    %3 = vector.load %arg4[%c0_3, %c0_4] : memref<16x256xf32, #tpu.memory_space<vmem>>, vector<16x256xf32>
    tpu.vector_store %arg4[%c0_3, %c0_4], %2 {strides = array<i32>} : memref<16x256xf32, #tpu.memory_space<vmem>>, vector<16x256xf32>,
    return
  }
  func.func @transform_0(%arg0: i32, %arg1: i32) -> (i32, i32) {
    %c0_i32 = arith.constant 0 : i32
    %c0_i32_0 = arith.constant 0 : i32
    return %arg1, %c0_i32 : i32, i32
  }
  func.func @transform_1(%arg0: i32, %arg1: i32) -> (i32, i32) {
    %c0_i32 = arith.constant 0 : i32
    %c0_i32_0 = arith.constant 0 : i32
    return %arg0, %c0_i32 : i32, i32
  }
  func.func @transform_2(%arg0: i32, %arg1: i32) -> (i32, i32) {
    %c0_i32 = arith.constant 0 : i32
    return %arg1, %arg0 : i32, i32
  }
}

</mosaic_0001>

<llo_original>
// kernel: tpu_custom_call.1
$region0: #{tpu_custom_call.1}
  #allocation0 [shape = 'u32[]', space=smem, size = 0x4, offset = 0x4, fixed_abs, tag = 'smem constant byte address 0x4 - core index']
  #allocation1 [shape = 'u32[144,128]{1,0:T(1,128)}', space=vmem, size = 0x12000, scoped, tag = 'internal scratch']
  %s0 = inlined_call_operand.hbm [shape: bf16[16,128], index: 0, kind: input, shape index: {}]
  %s1 = inlined_call_operand.hbm [shape: bf16[256,128], index: 1, kind: input, shape index: {}]
  %s2 = inlined_call_operand.hbm [shape: f32[16,256], index: 2, kind: output, shape index: {}]
  %s3 = sld [smem:[#allocation0]]
  $region26: #{tpu_custom_call.1} parent=0
    _
  %s5 = ssub.s32 1, %s3
  %s6 = scalar_select 0, %s5, %s3
  $region1: #{tpu_custom_call.1} parent=0
    #allocation2 [shape = 'u8[4096]{0}', space=vmem, size = 0x1000, scoped, tag = 'input window, operand 0, single buffered']
    #allocation3 [shape = 's32[1]{0}', space=sflag, size = 0x4, scoped, tag = 'scoped memory for tpu_custom_call.1']
    #allocation4 [shape = 's32[1]{0}', space=sflag, size = 0x4, scoped, tag = 'scoped memory for tpu_custom_call.1']
    #allocation5 [shape = 'u8[65536]{0}', space=vmem, size = 0x10000, scoped, tag = 'input window, operand 1, single buffered']
    #allocation6 [shape = 's32[1]{0}', space=sflag, size = 0x4, scoped, tag = 'scoped memory for tpu_custom_call.1']
    #allocation7 [shape = 'u8[16384]{0}', space=vmem, size = 0x4000, scoped, tag = 'output window, operand 0, single buffered']
    %7 = vsyncpa [#allocation3], 0
    %8 = vsyncpa [#allocation6], 0
    %9 = vsyncpa [#allocation4], 0
    // Predicated region
    $region2: #{tpu_custom_call.1} parent=1 // pred_check
      _
    $region3: #{tpu_custom_call.1} parent=1 // pred_check_branch
      %11 = sbr.rel (0) target = $region5
    $region4: #{tpu_custom_call.1} parent=1 // pred_region
      %s13 = ssub.s32 128, 128
      %14 = vsyncadd [#allocation3], %s13
      %s15 = sshll.u32 [#allocation2], 4
      %s16 = int_to_ptr.vmem [resolvable:$true] %s15
      %21 = dma.hbm_to_vmem [thread:$0]  %s0, 128, %s16, [#allocation3], 64, 64, 4
    $region5: #{tpu_custom_call.1} parent=1 // pred_fallthru
      _
    // Predicated region
    $region6: #{tpu_custom_call.1} parent=1 // pred_check
      _
    $region7: #{tpu_custom_call.1} parent=1 // pred_check_branch
      %23 = sbr.rel (0) target = $region9
    $region8: #{tpu_custom_call.1} parent=1 // pred_region
      %s25 = ssub.s32 2048, 2048
      %26 = vsyncadd [#allocation6], %s25
      %s27 = sshll.u32 [#allocation5], 4
      %s28 = int_to_ptr.vmem [resolvable:$true] %s27
      %33 = dma.hbm_to_vmem [thread:$0]  %s1, 2048, %s28, [#allocation6], 64, 64, 4
    $region9: #{tpu_custom_call.1} parent=1 // pred_fallthru
      _
    // Predicated region
    $region10: #{tpu_custom_call.1} parent=1 // pred_check
      _
    $region11: #{tpu_custom_call.1} parent=1 // pred_check_branch
      %35 = sbr.rel (0) target = $region13
    $region12: #{tpu_custom_call.1} parent=1 // pred_region
      %36 = dma.done [#allocation3], 128
    $region13: #{tpu_custom_call.1} parent=1 // pred_fallthru
      _
    // Predicated region
    $region14: #{tpu_custom_call.1} parent=1 // pred_check
      _
    $region15: #{tpu_custom_call.1} parent=1 // pred_check_branch
      %38 = sbr.rel (0) target = $region17
    $region16: #{tpu_custom_call.1} parent=1 // pred_region
      %39 = dma.done [#allocation6], 2048
    $region17: #{tpu_custom_call.1} parent=1 // pred_fallthru
      _
    %v41 = vld [vmem:[#allocation2] sm:$0xf]
    %v42 = vld [vmem:[#allocation2 + $0x4] sm:$0xf]
    %v43 = vld [vmem:[#allocation5] sm:$0xf]
    %v44 = vld [vmem:[#allocation5 + $0x4] sm:$0xf]
    %v45 = vld [vmem:[#allocation5 + $0x8] sm:$0xf]
    %v46 = vld [vmem:[#allocation5 + $0xc] sm:$0xf]
    %v47 = vld [vmem:[#allocation5 + $0x10] sm:$0xf]
    %v48 = vld [vmem:[#allocation5 + $0x14] sm:$0xf]
    %v49 = vld [vmem:[#allocation5 + $0x18] sm:$0xf]
    %v50 = vld [vmem:[#allocation5 + $0x1c] sm:$0xf]
    %v51 = vld [vmem:[#allocation5 + $0x20] sm:$0xf]
    %v52 = vld [vmem:[#allocation5 + $0x24] sm:$0xf]
    %v53 = vld [vmem:[#allocation5 + $0x28] sm:$0xf]
    %v54 = vld [vmem:[#allocation5 + $0x2c] sm:$0xf]
    %v55 = vld [vmem:[#allocation5 + $0x30] sm:$0xf]
    %v56 = vld [vmem:[#allocation5 + $0x34] sm:$0xf]
    %v57 = vld [vmem:[#allocation5 + $0x38] sm:$0xf]
    %v58 = vld [vmem:[#allocation5 + $0x3c] sm:$0xf]
    %v59 = vld [vmem:[#allocation5 + $0x40] sm:$0xf]
    %v60 = vld [vmem:[#allocation5 + $0x44] sm:$0xf]
    %v61 = vld [vmem:[#allocation5 + $0x48] sm:$0xf]
    %v62 = vld [vmem:[#allocation5 + $0x4c] sm:$0xf]
    %v63 = vld [vmem:[#allocation5 + $0x50] sm:$0xf]
    %v64 = vld [vmem:[#allocation5 + $0x54] sm:$0xf]
    %v65 = vld [vmem:[#allocation5 + $0x58] sm:$0xf]
    %v66 = vld [vmem:[#allocation5 + $0x5c] sm:$0xf]
    %v67 = vld [vmem:[#allocation5 + $0x60] sm:$0xf]
    %v68 = vld [vmem:[#allocation5 + $0x64] sm:$0xf]
    %v69 = vld [vmem:[#allocation5 + $0x68] sm:$0xf]
    %v70 = vld [vmem:[#allocation5 + $0x6c] sm:$0xf]
    %v71 = vld [vmem:[#allocation5 + $0x70] sm:$0xf]
    %v72 = vld [vmem:[#allocation5 + $0x74] sm:$0xf]
    %v73 = vld [vmem:[#allocation5 + $0x78] sm:$0xf]
    %v74 = vld [vmem:[#allocation5 + $0x7c] sm:$0xf]
    %v77 = vunpack.c.l.b16 %v41
    %v78 = vunpack.c.l.b16 %v42
    %v79 = vpack.c.b16 %v78, %v77
    %v113 = vunpack.c.l.b16 %v43
    %v114 = vunpack.c.l.b16 %v44
    %v115 = vunpack.c.l.b16 %v45
    %v116 = vunpack.c.l.b16 %v46
    %v117 = vunpack.c.l.b16 %v47
    %v118 = vunpack.c.l.b16 %v48
    %v119 = vunpack.c.l.b16 %v49
    %v120 = vunpack.c.l.b16 %v50
    %v121 = vunpack.c.l.b16 %v51
    %v122 = vunpack.c.l.b16 %v52
    %v123 = vunpack.c.l.b16 %v53
    %v124 = vunpack.c.l.b16 %v54
    %v125 = vunpack.c.l.b16 %v55
    %v126 = vunpack.c.l.b16 %v56
    %v127 = vunpack.c.l.b16 %v57
    %v128 = vunpack.c.l.b16 %v58
    %v129 = vunpack.c.l.b16 %v59
    %v130 = vunpack.c.l.b16 %v60
    %v131 = vunpack.c.l.b16 %v61
    %v132 = vunpack.c.l.b16 %v62
    %v133 = vunpack.c.l.b16 %v63
    %v134 = vunpack.c.l.b16 %v64
    %v135 = vunpack.c.l.b16 %v65
    %v136 = vunpack.c.l.b16 %v66
    %v137 = vunpack.c.l.b16 %v67
    %v138 = vunpack.c.l.b16 %v68
    %v139 = vunpack.c.l.b16 %v69
    %v140 = vunpack.c.l.b16 %v70
    %v141 = vunpack.c.l.b16 %v71
    %v142 = vunpack.c.l.b16 %v72
    %v143 = vunpack.c.l.b16 %v73
    %v144 = vunpack.c.l.b16 %v74
    %v145 = vpack.c.b16 %v114, %v113
    %v146 = vpack.c.b16 %v116, %v115
    %v147 = vpack.c.b16 %v118, %v117
    %v148 = vpack.c.b16 %v120, %v119
    %v149 = vpack.c.b16 %v122, %v121
    %v150 = vpack.c.b16 %v124, %v123
    %v151 = vpack.c.b16 %v126, %v125
    %v152 = vpack.c.b16 %v128, %v127
    %v153 = vpack.c.b16 %v130, %v129
    %v154 = vpack.c.b16 %v132, %v131
    %v155 = vpack.c.b16 %v134, %v133
    %v156 = vpack.c.b16 %v136, %v135
    %v157 = vpack.c.b16 %v138, %v137
    %v158 = vpack.c.b16 %v140, %v139
    %v159 = vpack.c.b16 %v142, %v141
    %v160 = vpack.c.b16 %v144, %v143
    %177 = vmatprep.subr.bf16.mxu0 0
    %178 = vmatpush1.bf16.xpose.msra.mxu0 %v145
    %179 = vmatprep.subr.bf16.mxu0 0
    %180 = vmatpush1.bf16.xpose.msra.mxu0 %v146
    %181 = vmatprep.subr.bf16.mxu0 0
    %182 = vmatpush1.bf16.xpose.msra.mxu0 %v147
    %183 = vmatprep.subr.bf16.mxu0 0
    %184 = vmatpush1.bf16.xpose.msra.mxu0 %v148
    %185 = vmatprep.subr.bf16.mxu0 0
    %186 = vmatpush1.bf16.xpose.msra.mxu0 %v149
    %187 = vmatprep.subr.bf16.mxu0 0
    %188 = vmatpush1.bf16.xpose.msra.mxu0 %v150
    %189 = vmatprep.subr.bf16.mxu0 0
    %190 = vmatpush1.bf16.xpose.msra.mxu0 %v151
    %191 = vmatprep.subr.bf16.mxu0 0
    %192 = vmatpush1.bf16.xpose.msra.mxu0 %v152
    %193 = vmatprep.subr.bf16.mxu0 0
    %194 = vmatpush1.bf16.xpose.msra.mxu0 %v153
    %195 = vmatprep.subr.bf16.mxu0 0
    %196 = vmatpush1.bf16.xpose.msra.mxu0 %v154
    %197 = vmatprep.subr.bf16.mxu0 0
    %198 = vmatpush1.bf16.xpose.msra.mxu0 %v155
    %199 = vmatprep.subr.bf16.mxu0 0
    %200 = vmatpush1.bf16.xpose.msra.mxu0 %v156
    %201 = vmatprep.subr.bf16.mxu0 0
    %202 = vmatpush1.bf16.xpose.msra.mxu0 %v157
    %203 = vmatprep.subr.bf16.mxu0 0
    %204 = vmatpush1.bf16.xpose.msra.mxu0 %v158
    %205 = vmatprep.subr.bf16.mxu0 0
    %206 = vmatpush1.bf16.xpose.msra.mxu0 %v159
    %207 = vmatprep.subr.bf16.mxu0 0
    %208 = vmatpush1.bf16.xpose.msra.mxu0 %v160
    %209 = vmatprep.mubr.bf16.mxu0 0
    %210 = vmatmul.mubr.bf16.gmra.mrb[0].mxu0 %v79
    %v211 = vpop.f32.mrb[0].mxu0
    %v212 = vadd.f32 0.0, %v211
    %v213 = vpop.f32.mrb[0].mxu0
    %v214 = vadd.f32 0.0, %v213
    %v215 = vpop.f32.mrb[0].mxu0
    %v216 = vadd.f32 0.0, %v215
    %v217 = vpop.f32.mrb[0].mxu0
    %v218 = vadd.f32 0.0, %v217
    %219 = vdwg.mxu0
    %220 = vst [vmem:[#allocation7] sm:$0xff] %v212
    %221 = vst [vmem:[#allocation7 + $0x8] sm:$0xff] %v214
    %222 = vst [vmem:[#allocation7 + $0x10] sm:$0xff] %v216
    %223 = vst [vmem:[#allocation7 + $0x18] sm:$0xff] %v218
    // Predicated region
    $region18: #{tpu_custom_call.1} parent=1 // pred_check
      _
    $region19: #{tpu_custom_call.1} parent=1 // pred_check_branch
      %225 = sbr.rel (0) target = $region21
    $region20: #{tpu_custom_call.1} parent=1 // pred_region
      %s227 = ssub.s32 512, 512
      %228 = vsyncadd [#allocation4], %s227
      %s229 = sshll.u32 [#allocation7], 4
      %s230 = int_to_ptr.vmem [resolvable:$true] %s229
      %235 = dma.vmem_to_hbm [thread:$0]  %s230, 512, %s2, [#allocation4], 256, 256, 16
    $region21: #{tpu_custom_call.1} parent=1 // pred_fallthru
      _
    // Predicated region
    $region22: #{tpu_custom_call.1} parent=1 // pred_check
      _
    $region23: #{tpu_custom_call.1} parent=1 // pred_check_branch
      %237 = sbr.rel (0) target = $region25
    $region24: #{tpu_custom_call.1} parent=1 // pred_region
      %238 = dma.done [#allocation4], 512
    $region25: #{tpu_custom_call.1} parent=1 // pred_fallthru
      _
    %239 = vsyncpa [#allocation3], 1
    %240 = vsyncpa [#allocation6], 1
    %241 = vsyncpa [#allocation4], 1

</llo_original>
